<compile_context>
chip_gen: v5e
topology: v5e:2x2
jax: 0.10.0
libtpu: 0.0.40
codegen_flags: <defaults>
</compile_context>

<pallas_src>
import math
import functools

import jax
import jax.numpy as jnp
from jax.experimental import pallas as pl
from jax.experimental.pallas import tpu as pltpu


def _round_up(x, m):
    return (x + m - 1) // m * m


def _cdiv(a, b):
    return (a + b - 1) // b


def _choose_tile(dim, cap, align):
    """Pad `dim` to a multiple of `align`, then pick a tile (<= cap, multiple of
    `align`) whose block count covers the padded dim exactly.  Waste is at most
    one `align` slab per block (never ~2x)."""
    padded = _round_up(max(dim, align), align)
    if padded <= cap:
        return padded, padded, 1
    nb = _cdiv(padded, cap)
    tile = _round_up(_cdiv(padded, nb), align)
    return tile, tile * nb, nb


def _equal_linear_kernel_1k(*refs, scale, lr_mul, has_bias):
    # Single K step: no accumulator scratch, no init/finalize passes.
    if has_bias:
        x_ref, w_ref, b_ref, o_ref = refs
    else:
        x_ref, w_ref, o_ref = refs
    acc = jnp.dot(x_ref[...], w_ref[...], preferred_element_type=jnp.float32)
    acc = acc * jnp.float32(scale)
    if has_bias:
        acc = acc + b_ref[...].astype(jnp.float32) * jnp.float32(lr_mul)
    o_ref[...] = acc.astype(o_ref.dtype)


def _equal_linear_kernel_mk(*refs, scale, lr_mul, has_bias):
    # Multi-step K reduction: f32 VMEM accumulator, K innermost in the grid.
    if has_bias:
        x_ref, w_ref, b_ref, o_ref, acc_ref = refs
    else:
        x_ref, w_ref, o_ref, acc_ref = refs
    k = pl.program_id(2)

    @pl.when(k == 0)
    def _():
        acc_ref[...] = jnp.zeros_like(acc_ref)

    acc_ref[...] += jnp.dot(x_ref[...], w_ref[...],
                            preferred_element_type=jnp.float32)

    @pl.when(k == pl.num_programs(2) - 1)
    def _():
        acc = acc_ref[...] * jnp.float32(scale)
        if has_bias:
            acc = acc + b_ref[...].astype(jnp.float32) * jnp.float32(lr_mul)
        o_ref[...] = acc.astype(o_ref.dtype)


def equal_linear(x, weight, bias, *, lr_mul=1.0,
                 tm_cap=2048, tk_cap=512, tn_cap=512,
                 vmem_budget_bytes=24 << 20):
    """x: (B, in_dim); weight: (out_dim, in_dim); bias: (out_dim,) or None."""
    B, in_dim = x.shape
    out_dim = weight.shape[0]
    scale = 1.0 / math.sqrt(in_dim) * lr_mul
    has_bias = bias is not None
    out_dtype = x.dtype
    in_itemsize = jnp.dtype(x.dtype).itemsize
    out_itemsize = jnp.dtype(out_dtype).itemsize

    # Pre-transpose weight once (layout plumbing in the wrapper, not the kernel).
    wt = weight.T  # (in_dim, out_dim)

    # --- Tile selection ------------------------------------------------------
    # Prefer 256-multiples for tk/tn when the padded dim allows it (v6e/v7x MXU
    # is 256x256); fall back to 128 otherwise.
    k_align = 256 if _round_up(in_dim, 128) % 256 == 0 else 128
    n_align = 256 if _round_up(out_dim, 128) % 256 == 0 else 128
    tk, Kp, gk = _choose_tile(in_dim, tk_cap, k_align)
    tn, Np, gn = _choose_tile(out_dim, tn_cap, n_align)
    multi_k = gk > 1

    def _ws_bytes(tm_, tk_, tn_):
        ws = 2 * tm_ * tk_ * in_itemsize            # x  (double-buffered)
        ws += 2 * tk_ * tn_ * in_itemsize           # weight.T
        ws += 2 * tm_ * tn_ * out_itemsize          # out
        if has_bias:
            ws += 2 * tn_ * 4
        if multi_k:
            ws += tm_ * tn_ * 4                     # f32 accumulator scratch
        return ws

    # M: pad only to a multiple of 8 (no large padded copy of x); shrink tm if
    # the working set would exceed the generation-safe VMEM budget.
    tm_cap_eff = tm_cap
    while True:
        tm, Mp, gm = _choose_tile(B, tm_cap_eff, 8)
        if _ws_bytes(tm, tk, tn) <= vmem_budget_bytes or tm_cap_eff <= 8:
            break
        tm_cap_eff = max(8, tm_cap_eff // 2)

    # Keep >= 2 parallel blocks when possible so both TensorCores are used on
    # dual-TC parts (v7x); near-zero cost on single-TC v5e/v6e.
    if gm * gn == 1 and Mp >= 16:
        tm, Mp, gm = _choose_tile(B, max(8, _round_up(_cdiv(Mp, 2), 8)), 8)

    ws = _ws_bytes(tm, tk, tn)
    vmem_limit = int(min(max(ws + (4 << 20), 16 << 20), 32 << 20))

    # --- Padding (small: at most one slab per dim) ---------------------------
    # TODO(synk): for very large, badly aligned B this still materializes one
    # padded copy of x; a ragged M tail (separate small call) would avoid it.
    def _pad2d(a, d0, d1):
        p0, p1 = d0 - a.shape[0], d1 - a.shape[1]
        if p0 or p1:
            a = jnp.pad(a, ((0, p0), (0, p1)))
        return a

    x_p = _pad2d(x, Mp, Kp)
    wt_p = _pad2d(wt, Kp, Np)

    operands = [x_p, wt_p]
    if has_bias:
        b_p = jnp.zeros((1, Np), dtype=jnp.float32).at[0, :out_dim].set(
            bias.astype(jnp.float32))
        operands.append(b_p)

    # --- Grid / specs ---------------------------------------------------------
    if multi_k:
        grid = (gm, gn, gk)
        dims = ("parallel", "parallel", "arbitrary")
        x_map = lambda i, j, k: (i, k)
        w_map = lambda i, j, k: (k, j)
        b_map = lambda i, j, k: (0, j)
        o_map = lambda i, j, k: (i, j)
        kernel = functools.partial(_equal_linear_kernel_mk, scale=scale,
                                   lr_mul=lr_mul, has_bias=has_bias)
        scratch = [pltpu.VMEM((tm, tn), jnp.float32)]
    else:
        grid = (gm, gn)
        dims = ("parallel", "parallel")
        x_map = lambda i, j: (i, 0)
        w_map = lambda i, j: (0, j)
        b_map = lambda i, j: (0, j)
        o_map = lambda i, j: (i, j)
        kernel = functools.partial(_equal_linear_kernel_1k, scale=scale,
                                   lr_mul=lr_mul, has_bias=has_bias)
        scratch = []

    in_specs = [pl.BlockSpec((tm, tk), x_map),
                pl.BlockSpec((tk, tn), w_map)]
    if has_bias:
        in_specs.append(pl.BlockSpec((1, tn), b_map))

    out_p = pl.pallas_call(
        kernel,
        out_shape=jax.ShapeDtypeStruct((Mp, Np), out_dtype),
        grid_spec=pltpu.PrefetchScalarGridSpec(
            num_scalar_prefetch=0,
            grid=grid,
            in_specs=in_specs,
            out_specs=pl.BlockSpec((tm, tn), o_map),
            scratch_shapes=scratch,
        ),
        compiler_params=pltpu.CompilerParams(
            dimension_semantics=dims,
            vmem_limit_bytes=vmem_limit),
    )(*operands)

    # Slice back to the logical shape.
    if (Mp, Np) != (B, out_dim):
        out_p = out_p[:B, :out_dim]
    return out_p


if __name__ == "__main__":
    key = jax.random.PRNGKey(0)
    k_x, k_w = jax.random.split(key)

    batch, in_dim, out_dim = 8, 32, 32
    lr_mul = 0.01          # typical PiGAN mapping-network value
    bias_init = 0.0

    # Deterministic parameter init mirroring __init__:
    #   weight = randn(out_dim, in_dim) / lr_mul ;  bias = full(out_dim, bias_init)
    weight = jax.random.normal(k_w, (out_dim, in_dim), dtype=jnp.float32) / lr_mul
    bias = jnp.full((out_dim,), bias_init, dtype=jnp.float32)
    x = jax.random.normal(k_x, (batch, in_dim), dtype=jnp.float32)

    out = equal_linear(x, weight, bias, lr_mul=lr_mul)
    out = jax.block_until_ready(out)

    # Reference check in plain JAX (same math as F.linear with scaled weight/bias).
    scale = 1.0 / math.sqrt(in_dim) * lr_mul
    ref = x @ (weight * scale).T + bias * lr_mul
    assert out.shape == (batch, out_dim)
    assert jnp.allclose(out, ref, atol=1e-4, rtol=1e-4)

    # Also exercise the no-bias path (bias operand is dropped entirely).
    out_nb = jax.block_until_ready(equal_linear(x, weight, None, lr_mul=lr_mul))
    ref_nb = x @ (weight * scale).T
    assert jnp.allclose(out_nb, ref_nb, atol=1e-4, rtol=1e-4)

    # TODO(synk): for the full PiGAN mapping MLP, fuse the EqualLinear+LeakyReLU
    # stack into one VMEM-resident kernel instead of per-layer pallas_calls, and
    # optionally cast x/W to bf16 (keeping the f32 epilogue) for the v6e/v7x MXU.

    print("KERNEL_OK")
</pallas_src>

<mosaic_0001>
module attributes {stable_mosaic.version = 11 : i64} {
  func.func @_equal_linear_kernel_1k(%arg0: i32, %arg1: i32, %arg2: memref<8x128xf32, #tpu.memory_space<vmem>>, %arg3: memref<128x128xf32, #tpu.memory_space<vmem>>, %arg4: memref<1x128xf32, #tpu.memory_space<vmem>>, %arg5: memref<8x128xf32, #tpu.memory_space<vmem>>) attributes {dimension_semantics = [#tpu.dimension_semantics<parallel>, #tpu.dimension_semantics<parallel>], iteration_bounds = array<i64: 1, 1>, scalar_prefetch = 0 : i64, scratch_operands = 0 : i64, tpu.core_type = #tpu.core_type<tc>, window_params = [{transform_indices = @transform_0, window_bounds = array<i64: 8, 128>}, {transform_indices = @transform_1, window_bounds = array<i64: 128, 128>}, {transform_indices = @transform_2, window_bounds = array<i64: 1, 128>}, {transform_indices = @transform_3, window_bounds = array<i64: 8, 128>}]} {
    %c0 = arith.constant 0 : index
    %c0_0 = arith.constant 0 : index
    %0 = vector.load %arg2[%c0, %c0_0] : memref<8x128xf32, #tpu.memory_space<vmem>>, vector<8x128xf32>
    %c0_1 = arith.constant 0 : index
    %c0_2 = arith.constant 0 : index
    %1 = vector.load %arg3[%c0_1, %c0_2] : memref<128x128xf32, #tpu.memory_space<vmem>>, vector<128x128xf32>
    %cst = arith.constant dense<0.000000e+00> : vector<8x128xf32>
    %2 = tpu.matmul %0, %1, %cst {dimension_numbers = #tpu.dot_dimension_numbers<[1], [0], [0], [1], [0, 0, 1, 1], [], []>} : vector<8x128xf32>, vector<128x128xf32>, vector<8x128xf32> -> vector<8x128xf32>
    %cst_3 = arith.constant 0.00176776689 : f32
    %3 = vector.broadcast %cst_3 : f32 to vector<8x128xf32>
    %4 = arith.mulf %2, %3 : vector<8x128xf32>
    %c0_4 = arith.constant 0 : index
    %c0_5 = arith.constant 0 : index
    %5 = vector.load %arg4[%c0_4, %c0_5] : memref<1x128xf32, #tpu.memory_space<vmem>>, vector<1x128xf32>
    %cst_6 = arith.constant 0.00999999977 : f32
    %6 = vector.broadcast %cst_6 : f32 to vector<1x128xf32>
    %7 = arith.mulf %5, %6 : vector<1x128xf32>
    %8 = vector.broadcast %7 : vector<1x128xf32> to vector<8x128xf32>
    %9 = arith.addf %4, %8 : vector<8x128xf32>
    %c0_7 = arith.constant 0 : index
    %c0_8 = arith.constant 0 : index
    %10 = vector.load %arg5[%c0_7, %c0_8] : memref<8x128xf32, #tpu.memory_space<vmem>>, vector<8x128xf32>
    tpu.vector_store %arg5[%c0_7, %c0_8], %9 {strides = array<i32>} : memref<8x128xf32, #tpu.memory_space<vmem>>, vector<8x128xf32>,
    return
  }
  func.func @transform_0(%arg0: i32, %arg1: i32) -> (i32, i32) {
    %c0_i32 = arith.constant 0 : i32
    %c0_i32_0 = arith.constant 0 : i32
    return %arg0, %c0_i32 : i32, i32
  }
  func.func @transform_1(%arg0: i32, %arg1: i32) -> (i32, i32) {
    %c0_i32 = arith.constant 0 : i32
    %c0_i32_0 = arith.constant 0 : i32
    return %c0_i32, %arg1 : i32, i32
  }
  func.func @transform_2(%arg0: i32, %arg1: i32) -> (i32, i32) {
    %c0_i32 = arith.constant 0 : i32
    %c0_i32_0 = arith.constant 0 : i32
    return %c0_i32, %arg1 : i32, i32
  }
  func.func @transform_3(%arg0: i32, %arg1: i32) -> (i32, i32) {
    %c0_i32 = arith.constant 0 : i32
    return %arg0, %arg1 : i32, i32
  }
}

</mosaic_0001>

<llo_original>
// kernel: tpu_custom_call.1
$region0: #{tpu_custom_call.1}
  #allocation0 [shape = 'u32[]', space=smem, size = 0x4, offset = 0x4, fixed_abs, tag = 'smem constant byte address 0x4 - core index']
  #allocation1 [shape = 'u32[72,128]{1,0:T(1,128)}', space=vmem, size = 0x9000, scoped, tag = 'internal scratch']
  %s0 = inlined_call_operand.hbm [shape: f32[8,128], index: 0, kind: input, shape index: {}]
  %s1 = inlined_call_operand.hbm [shape: f32[128,128], index: 1, kind: input, shape index: {}]
  %s2 = inlined_call_operand.vmem [shape: f32[1,128], index: 2, kind: input, shape index: {}]
  %s3 = inlined_call_operand.hbm [shape: f32[8,128], index: 3, kind: output, shape index: {}]
  %s4 = sld [smem:[#allocation0]]
  $region30: #{tpu_custom_call.1} parent=0
    _
  %s6 = ssub.s32 1, %s4
  %s7 = scalar_select 0, %s6, %s4
  $region1: #{tpu_custom_call.1} parent=0
    #allocation2 [shape = 'u8[4096]{0}', space=vmem, size = 0x1000, scoped, tag = 'input window, operand 0, single buffered']
    #allocation3 [shape = 's32[1]{0}', space=sflag, size = 0x4, scoped, tag = 'scoped memory for tpu_custom_call.1']
    #allocation4 [shape = 's32[1]{0}', space=sflag, size = 0x4, scoped, tag = 'scoped memory for tpu_custom_call.1']
    #allocation5 [shape = 'u8[65536]{0}', space=vmem, size = 0x10000, scoped, tag = 'input window, operand 1, single buffered']
    #allocation6 [shape = 's32[1]{0}', space=sflag, size = 0x4, scoped, tag = 'scoped memory for tpu_custom_call.1']
    #allocation7 [shape = 'u8[4096]{0}', space=vmem, size = 0x1000, scoped, tag = 'output window, operand 0, single buffered']
    %8 = vsyncpa [#allocation3], 0
    %9 = vsyncpa [#allocation6], 0
    %10 = vsyncpa [#allocation4], 0
    // Predicated region
    $region2: #{tpu_custom_call.1} parent=1 // pred_check
      _
    $region3: #{tpu_custom_call.1} parent=1 // pred_check_branch
      %12 = sbr.rel (0) target = $region5
    $region4: #{tpu_custom_call.1} parent=1 // pred_region
      %14 = vsyncadd [#allocation3], 0
      %s16 = sshll.u32 %s0, 4
      %s17 = int_to_ptr.hbm [resolvable:$true] %s16
      %s18 = sshll.u32 [#allocation2], 4
      %s19 = int_to_ptr.vmem [resolvable:$true] %s18
      %21 = dma.hbm_to_vmem [thread:$0]  %s17, 128, %s19, [#allocation3]
    $region5: #{tpu_custom_call.1} parent=1 // pred_fallthru
      _
    // Predicated region
    $region6: #{tpu_custom_call.1} parent=1 // pred_check
      _
    $region7: #{tpu_custom_call.1} parent=1 // pred_check_branch
      %23 = sbr.rel (0) target = $region9
    $region8: #{tpu_custom_call.1} parent=1 // pred_region
      %25 = vsyncadd [#allocation6], 0
      %s26 = sshll.u32 %s1, 4
      %s27 = int_to_ptr.hbm [resolvable:$true] %s26
      %s28 = sshll.u32 [#allocation5], 4
      %s29 = int_to_ptr.vmem [resolvable:$true] %s28
      %34 = dma.hbm_to_vmem [thread:$0]  %s27, 2048, %s29, [#allocation6], 128, 128, 8
    $region9: #{tpu_custom_call.1} parent=1 // pred_fallthru
      _
    // Predicated region
    $region10: #{tpu_custom_call.1} parent=1 // pred_check
      _
    $region11: #{tpu_custom_call.1} parent=1 // pred_check_branch
      %36 = sbr.rel (0) target = $region13
    $region12: #{tpu_custom_call.1} parent=1 // pred_region
      _
    $region13: #{tpu_custom_call.1} parent=1 // pred_fallthru
      _
    // Predicated region
    $region14: #{tpu_custom_call.1} parent=1 // pred_check
      _
    $region15: #{tpu_custom_call.1} parent=1 // pred_check_branch
      %38 = sbr.rel (0) target = $region17
    $region16: #{tpu_custom_call.1} parent=1 // pred_region
      %40 = dma.done [#allocation3], 128
    $region17: #{tpu_custom_call.1} parent=1 // pred_fallthru
      _
    // Predicated region
    $region18: #{tpu_custom_call.1} parent=1 // pred_check
      _
    $region19: #{tpu_custom_call.1} parent=1 // pred_check_branch
      %42 = sbr.rel (0) target = $region21
    $region20: #{tpu_custom_call.1} parent=1 // pred_region
      %44 = dma.done [#allocation6], 2048
    $region21: #{tpu_custom_call.1} parent=1 // pred_fallthru
      _
    %v45 = vld [vmem:[#allocation2] sm:$0xff]
    %v46 = vld [vmem:[#allocation5] sm:$0xff]
    %v47 = vld [vmem:[#allocation5 + $0x8] sm:$0xff]
    %v48 = vld [vmem:[#allocation5 + $0x10] sm:$0xff]
    %v49 = vld [vmem:[#allocation5 + $0x18] sm:$0xff]
    %v50 = vld [vmem:[#allocation5 + $0x20] sm:$0xff]
    %v51 = vld [vmem:[#allocation5 + $0x28] sm:$0xff]
    %v52 = vld [vmem:[#allocation5 + $0x30] sm:$0xff]
    %v53 = vld [vmem:[#allocation5 + $0x38] sm:$0xff]
    %v54 = vld [vmem:[#allocation5 + $0x40] sm:$0xff]
    %v55 = vld [vmem:[#allocation5 + $0x48] sm:$0xff]
    %v56 = vld [vmem:[#allocation5 + $0x50] sm:$0xff]
    %v57 = vld [vmem:[#allocation5 + $0x58] sm:$0xff]
    %v58 = vld [vmem:[#allocation5 + $0x60] sm:$0xff]
    %v59 = vld [vmem:[#allocation5 + $0x68] sm:$0xff]
    %v60 = vld [vmem:[#allocation5 + $0x70] sm:$0xff]
    %v61 = vld [vmem:[#allocation5 + $0x78] sm:$0xff]
    %62 = vmatpush.msra.mxu0 %v61
    %63 = vmatpush.msra.mxu0 %v60
    %64 = vmatpush.msra.mxu0 %v59
    %65 = vmatpush.msra.mxu0 %v58
    %66 = vmatpush.msra.mxu0 %v57
    %67 = vmatpush.msra.mxu0 %v56
    %68 = vmatpush.msra.mxu0 %v55
    %69 = vmatpush.msra.mxu0 %v54
    %70 = vmatpush.msra.mxu0 %v53
    %71 = vmatpush.msra.mxu0 %v52
    %72 = vmatpush.msra.mxu0 %v51
    %73 = vmatpush.msra.mxu0 %v50
    %74 = vmatpush.msra.mxu0 %v49
    %75 = vmatpush.msra.mxu0 %v48
    %76 = vmatpush.msra.mxu0 %v47
    %77 = vmatpush.msra.mxu0 %v46
    %78 = vmatmul.f32.gmra.mxu0 %v45
    %v79 = vpop.f32.mrf.mxu0
    %v80 = vadd.f32 0.0, %v79
    %81 = vdwg.mxu0
    %v82 = vmul.f32 %v80, 0.0017677669
    %v83 = vld [vmem:[%s2] sm:$0x1]
    %v84 = vmul.f32 %v83, 0.01
    %v86 = vperm.slane %v84, 0
    %v88 = vadd.f32 %v82, %v86
    %89 = vst [vmem:[#allocation7] sm:$0xff] %v88
    // Predicated region
    $region22: #{tpu_custom_call.1} parent=1 // pred_check
      _
    $region23: #{tpu_custom_call.1} parent=1 // pred_check_branch
      %91 = sbr.rel (0) target = $region25
    $region24: #{tpu_custom_call.1} parent=1 // pred_region
      %93 = vsyncadd [#allocation4], 0
      %s95 = sshll.u32 [#allocation7], 4
      %s96 = int_to_ptr.vmem [resolvable:$true] %s95
      %s97 = sshll.u32 %s3, 4
      %s98 = int_to_ptr.hbm [resolvable:$true] %s97
      %100 = dma.vmem_to_hbm [thread:$0]  %s96, 128, %s98, [#allocation4]
    $region25: #{tpu_custom_call.1} parent=1 // pred_fallthru
      _
    // Predicated region
    $region26: #{tpu_custom_call.1} parent=1 // pred_check
      _
    $region27: #{tpu_custom_call.1} parent=1 // pred_check_branch
      %102 = sbr.rel (0) target = $region29
    $region28: #{tpu_custom_call.1} parent=1 // pred_region
      %104 = dma.done [#allocation4], 128
    $region29: #{tpu_custom_call.1} parent=1 // pred_fallthru
      _
    %105 = vsyncpa [#allocation3], 1
    %106 = vsyncpa [#allocation6], 1
    %107 = vsyncpa [#allocation4], 1

</llo_original>
